<compile_context>
chip_gen: v5e
topology: v5e:2x2
jax: 0.10.0
libtpu: 0.0.40
codegen_flags: <defaults>
</compile_context>

<pallas_src>
import functools

import jax
import jax.numpy as jnp
from jax.experimental import pallas as pl
from jax.experimental.pallas import tpu as pltpu


def _layernorm_kernel(idx_ref, x_ref, w_ref, b_ref, o_ref, *, eps):
    # idx_ref: SMEM scalar-prefetch ref (consumed only by the index_maps).
    # x_ref / w_ref / b_ref / o_ref: (1, R, C) lane-dense blocks; one grid step
    # covers one full sample, so the reduction spans the whole block.
    del idx_ref
    x = x_ref[...].astype(jnp.float32)

    # Two-pass mean / biased variance in f32 (matches F.layer_norm and avoids
    # the E[x^2] - E[x]^2 cancellation issue).
    mean = jnp.mean(x)
    centered = x - mean
    var = jnp.mean(centered * centered)
    inv = jax.lax.rsqrt(var + eps)

    # Fused affine epilogue: (x - mean) * (inv * w) + b.
    # Params are cast to f32 exactly once; single fused store.
    scale = inv * w_ref[...].astype(jnp.float32)
    o_ref[...] = (centered * scale + b_ref[...].astype(jnp.float32)).astype(o_ref.dtype)


def _lane_dense_factors(d):
    """Split the flattened normalized size D into (rows, cols) with cols a
    multiple of 128 whenever possible (unmasked, lane-dense stores)."""
    if d % 128 == 0:
        return d // 128, 128
    # Fallback: one row of length D. Block dims equal the full array dims, so
    # this always compiles (only the ragged tail stores are masked).
    return 1, d


def _param_block_spec(r, c, index_map):
    """BlockSpec for grid-invariant weight/bias: single-buffered if supported."""
    if hasattr(pl, "Buffered"):
        try:
            return pl.BlockSpec((1, r, c), index_map, pipeline_mode=pl.Buffered(1))
        except TypeError:
            pass
    return pl.BlockSpec((1, r, c), index_map)


def layer_norm_pallas(x, weight_nsh, bias_nsh, idx, eps=1e-5):
    """x: (B, S, H); weight_nsh/bias_nsh: (N_idx, S, H); idx: int (python or 0-d)."""
    B, S, H = x.shape
    N = weight_nsh.shape[0]
    D = S * H
    R, C = _lane_dense_factors(D)

    # Free (contiguous) reshapes into the lane-dense layout.
    x2 = x.reshape(B, R, C)
    w2 = weight_nsh.reshape(N, R, C)
    b2 = bias_nsh.reshape(N, R, C)
    idx_arr = jnp.asarray(idx, dtype=jnp.int32).reshape(1)

    kernel = functools.partial(_layernorm_kernel, eps=eps)

    x_spec = pl.BlockSpec((1, R, C), lambda b, idx_ref: (b, 0, 0))
    p_spec = _param_block_spec(R, C, lambda b, idx_ref: (idx_ref[0], 0, 0))
    o_spec = pl.BlockSpec((1, R, C), lambda b, idx_ref: (b, 0, 0))

    grid_spec = pltpu.PrefetchScalarGridSpec(
        num_scalar_prefetch=1,
        grid=(B,),
        in_specs=[x_spec, p_spec, p_spec],
        out_specs=o_spec,
    )

    # Strictly HBM-bandwidth bound: read x, read params once, write out.
    cost = pl.CostEstimate(
        flops=8 * B * D,
        transcendentals=B,
        bytes_accessed=2 * B * D * x.dtype.itemsize
        + 2 * D * weight_nsh.dtype.itemsize,
    )

    # VMEM budget: double-buffered x/out blocks + single-buffered params
    # + f32 compute temporaries. Only override the scoped default if needed.
    blk = R * C
    need = (4 * blk * x.dtype.itemsize
            + 2 * blk * weight_nsh.dtype.itemsize
            + 4 * blk * 4)
    vmem_limit = None
    if need > 16 * 1024 * 1024:  # above the smallest (v5e) scoped default
        vmem_limit = min(int(need * 1.25), 96 * 1024 * 1024)

    out2 = pl.pallas_call(
        kernel,
        out_shape=jax.ShapeDtypeStruct((B, R, C), x.dtype),
        grid_spec=grid_spec,
        compiler_params=pltpu.CompilerParams(
            dimension_semantics=("parallel",),
            vmem_limit_bytes=vmem_limit,
        ),
        cost_estimate=cost,
    )(idx_arr, x2, w2, b2)

    return out2.reshape(B, S, H)


def layer_norm_ref(x, weight_nsh, bias_nsh, idx, eps=1e-5):
    """Pure-JAX reference mirroring F.layer_norm over all non-batch dims."""
    x32 = x.astype(jnp.float32)
    mean = jnp.mean(x32, axis=(1, 2), keepdims=True)
    var = jnp.mean((x32 - mean) ** 2, axis=(1, 2), keepdims=True)
    y = (x32 - mean) * jax.lax.rsqrt(var + eps)
    w = weight_nsh[idx]  # (S, H)
    b = bias_nsh[idx]
    return (y * w[None] + b[None]).astype(x.dtype)


if __name__ == "__main__":
    # PyTorch terms: normalized_shape = (S, N_idx, H), input = (B, S, H),
    # idx selects the middle dim of the params.
    B, S, H, N_IDX = 2, 8, 32, 4
    eps = 1e-5
    idx = 1

    key = jax.random.PRNGKey(0)
    kx, kw, kb = jax.random.split(key, 3)
    x = jax.random.normal(kx, (B, S, H), dtype=jnp.float32)

    # Use random affine params (instead of reset_parameters' ones/zeros) so the
    # idx selection and affine path are actually exercised. PyTorch layout is
    # (S, N_idx, H); kernel-side layout is (N_idx, S, H) so idx indexes dim 0.
    weight_pt = jax.random.normal(kw, (S, N_IDX, H), dtype=jnp.float32)
    bias_pt = jax.random.normal(kb, (S, N_IDX, H), dtype=jnp.float32)
    weight_nsh = jnp.transpose(weight_pt, (1, 0, 2))
    bias_nsh = jnp.transpose(bias_pt, (1, 0, 2))

    out = layer_norm_pallas(x, weight_nsh, bias_nsh, idx, eps=eps)
    out = jax.block_until_ready(out)

    ref = layer_norm_ref(x, weight_nsh, bias_nsh, idx, eps=eps)
    assert out.shape == ref.shape and out.dtype == ref.dtype
    assert jnp.max(jnp.abs(out - ref)) < 1e-4

    print("KERNEL_OK")
</pallas_src>

<mosaic_0001>
module attributes {stable_mosaic.version = 11 : i64} {
  func.func @_layernorm_kernel(%arg0: i32, %arg1: memref<1xi32, #tpu.memory_space<smem>>, %arg2: memref<1x2x128xf32, #tpu.memory_space<vmem>>, %arg3: memref<1x2x128xf32, #tpu.memory_space<vmem>>, %arg4: memref<1x2x128xf32, #tpu.memory_space<vmem>>, %arg5: memref<1x2x128xf32, #tpu.memory_space<vmem>>) attributes {dimension_semantics = [#tpu.dimension_semantics<parallel>], iteration_bounds = array<i64: 2>, scalar_prefetch = 1 : i64, scratch_operands = 0 : i64, tpu.core_type = #tpu.core_type<tc>, window_params = [{transform_indices = @transform_0, window_bounds = array<i64: 1, 2, 128>}, {pipeline_mode = #tpu.pipeline_mode<synchronous>, transform_indices = @transform_1, window_bounds = array<i64: 1, 2, 128>}, {pipeline_mode = #tpu.pipeline_mode<synchronous>, transform_indices = @transform_2, window_bounds = array<i64: 1, 2, 128>}, {transform_indices = @transform_3, window_bounds = array<i64: 1, 2, 128>}]} {
    %c0 = arith.constant 0 : index
    %c0_0 = arith.constant 0 : index
    %c0_1 = arith.constant 0 : index
    %0 = vector.load %arg2[%c0, %c0_0, %c0_1] : memref<1x2x128xf32, #tpu.memory_space<vmem>>, vector<1x2x128xf32>
    %1 = vector.shape_cast %0 : vector<1x2x128xf32> to vector<1x1x2x128xf32>
    %cst = arith.constant dense<0.000000e+00> : vector<1xf32>
    %2 = vector.multi_reduction <add>, %1, %cst [1, 2, 3] : vector<1x1x2x128xf32> to vector<1xf32>
    %3 = vector.shape_cast %2 : vector<1xf32> to vector<1x1x1x1xf32>
    %4 = vector.extract %3[0, 0, 0, 0] : f32 from vector<1x1x1x1xf32>
    %cst_2 = arith.constant 2.560000e+02 : f32
    %5 = arith.divf %4, %cst_2 : f32
    %6 = vector.broadcast %5 : f32 to vector<1x2x128xf32>
    %7 = arith.subf %0, %6 : vector<1x2x128xf32>
    %8 = arith.mulf %7, %7 : vector<1x2x128xf32>
    %9 = vector.shape_cast %8 : vector<1x2x128xf32> to vector<1x1x2x128xf32>
    %cst_3 = arith.constant dense<0.000000e+00> : vector<1xf32>
    %10 = vector.multi_reduction <add>, %9, %cst_3 [1, 2, 3] : vector<1x1x2x128xf32> to vector<1xf32>
    %11 = vector.shape_cast %10 : vector<1xf32> to vector<1x1x1x1xf32>
    %12 = vector.extract %11[0, 0, 0, 0] : f32 from vector<1x1x1x1xf32>
    %cst_4 = arith.constant 2.560000e+02 : f32
    %13 = arith.divf %12, %cst_4 : f32
    %cst_5 = arith.constant 9.99999974E-6 : f32
    %14 = arith.addf %13, %cst_5 : f32
    %15 = math.rsqrt %14 : f32
    %c0_6 = arith.constant 0 : index
    %c0_7 = arith.constant 0 : index
    %c0_8 = arith.constant 0 : index
    %16 = vector.load %arg3[%c0_6, %c0_7, %c0_8] : memref<1x2x128xf32, #tpu.memory_space<vmem>>, vector<1x2x128xf32>
    %17 = vector.broadcast %15 : f32 to vector<1x2x128xf32>
    %18 = arith.mulf %17, %16 : vector<1x2x128xf32>
    %19 = arith.mulf %7, %18 : vector<1x2x128xf32>
    %c0_9 = arith.constant 0 : index
    %c0_10 = arith.constant 0 : index
    %c0_11 = arith.constant 0 : index
    %20 = vector.load %arg4[%c0_9, %c0_10, %c0_11] : memref<1x2x128xf32, #tpu.memory_space<vmem>>, vector<1x2x128xf32>
    %21 = arith.addf %19, %20 : vector<1x2x128xf32>
    %c0_12 = arith.constant 0 : index
    %c0_13 = arith.constant 0 : index
    %c0_14 = arith.constant 0 : index
    %22 = vector.load %arg5[%c0_12, %c0_13, %c0_14] : memref<1x2x128xf32, #tpu.memory_space<vmem>>, vector<1x2x128xf32>
    tpu.vector_store %arg5[%c0_12, %c0_13, %c0_14], %21 {strides = array<i32>} : memref<1x2x128xf32, #tpu.memory_space<vmem>>, vector<1x2x128xf32>,
    return
  }
  func.func @transform_0(%arg0: i32, %arg1: memref<1xi32, #tpu.memory_space<smem>>) -> (i32, i32, i32) {
    %c0_i32 = arith.constant 0 : i32
    %c0_i32_0 = arith.constant 0 : i32
    %c0_i32_1 = arith.constant 0 : i32
    return %arg0, %c0_i32, %c0_i32_0 : i32, i32, i32
  }
  func.func @transform_1(%arg0: i32, %arg1: memref<1xi32, #tpu.memory_space<smem>>) -> (i32, i32, i32) {
    %c0 = arith.constant 0 : index
    %0 = memref.load %arg1[%c0] : memref<1xi32, #tpu.memory_space<smem>>
    %c0_i32 = arith.constant 0 : i32
    %c0_i32_0 = arith.constant 0 : i32
    %c0_i32_1 = arith.constant 0 : i32
    return %0, %c0_i32, %c0_i32_0 : i32, i32, i32
  }
  func.func @transform_2(%arg0: i32, %arg1: memref<1xi32, #tpu.memory_space<smem>>) -> (i32, i32, i32) {
    %c0 = arith.constant 0 : index
    %0 = memref.load %arg1[%c0] : memref<1xi32, #tpu.memory_space<smem>>
    %c0_i32 = arith.constant 0 : i32
    %c0_i32_0 = arith.constant 0 : i32
    %c0_i32_1 = arith.constant 0 : i32
    return %0, %c0_i32, %c0_i32_0 : i32, i32, i32
  }
  func.func @transform_3(%arg0: i32, %arg1: memref<1xi32, #tpu.memory_space<smem>>) -> (i32, i32, i32) {
    %c0_i32 = arith.constant 0 : i32
    %c0_i32_0 = arith.constant 0 : i32
    %c0_i32_1 = arith.constant 0 : i32
    return %arg0, %c0_i32, %c0_i32_0 : i32, i32, i32
  }
}

</mosaic_0001>

<llo_original>
// kernel: tpu_custom_call.1
$region0: #{tpu_custom_call.1}
  #allocation0 [shape = 'u32[]', space=smem, size = 0x4, offset = 0x4, fixed_abs, tag = 'smem constant byte address 0x4 - core index']
  #allocation1 [shape = 'u32[72,128]{1,0:T(1,128)}', space=vmem, size = 0x9000, scoped, tag = 'internal scratch']
  #allocation2 [shape = 's32[1]{0}', space=sflag, size = 0x4, scoped, tag = 'scoped memory for tpu_custom_call.1']
  #allocation3 [shape = 's32[1]{0:T(128)S(6)}', space=smem, size = 0x200, scoped, tag = 'prefetched SMEM operand 0']
  %s0 = inlined_call_operand.<no memory space> [shape: s32[1], index: 0, kind: input, shape index: {}]
  %s1 = inlined_call_operand.hbm [shape: f32[2,2,128], index: 1, kind: input, shape index: {}]
  %s2 = inlined_call_operand.hbm [shape: f32[4,2,128], index: 2, kind: input, shape index: {}]
  %s3 = inlined_call_operand.hbm [shape: f32[4,2,128], index: 3, kind: input, shape index: {}]
  %s4 = inlined_call_operand.hbm [shape: f32[2,2,128], index: 4, kind: output, shape index: {}]
  %s5 = sld [smem:[#allocation0]]
  $region57: #{tpu_custom_call.1} parent=0
    _
  %s7 = ssub.s32 1, %s5
  %s8 = scalar_select 0, %s7, %s5
  %9 = sst [smem:[#allocation3]] %s0
  $region1: #{tpu_custom_call.1} parent=0
    #allocation4 [shape = 'u8[2048]{0}', space=vmem, size = 0x800, scoped, tag = 'input window, operand 1']
    #allocation5 [shape = 's32[2]{0}', space=sflag, size = 0x8, scoped, tag = 'scoped memory for tpu_custom_call.1']
    #allocation6 [shape = 's32[2]{0}', space=sflag, size = 0x8, scoped, tag = 'scoped memory for tpu_custom_call.1']
    #allocation7 [shape = 'u8[1024]{0}', space=vmem, size = 0x400, scoped, tag = 'input window, operand 2, single buffered']
    #allocation8 [shape = 's32[1]{0}', space=sflag, size = 0x4, scoped, tag = 'scoped memory for tpu_custom_call.1']
    #allocation9 [shape = 'u8[1024]{0}', space=vmem, size = 0x400, scoped, tag = 'input window, operand 3, single buffered']
    #allocation10 [shape = 'u8[2048]{0}', space=vmem, size = 0x800, scoped, tag = 'output window, operand 0']
    %10 = vsyncpa [#allocation5], 0
    %s11 = scalar_lea.sflag [#allocation5], 1
    %12 = vsyncpa %s11, 0
    %13 = vsyncpa [#allocation8], 0
    %14 = vsyncpa [#allocation6], 0
    %s15 = scalar_lea.sflag [#allocation6], 1
    %16 = vsyncpa %s15, 0
    loop: start=0, step=1, limit=4
    $region2: #{tpu_custom_call.1} parent=1 // loop_pre_header
      _
    $region3: #{tpu_custom_call.1} parent=1 // loop_header
      %s18 = sphi 0, %s22
      %p19 = scmp.ge.s32.totalorder %s18, 4
      %s28 = sphi 0, %s30
      %s31 = sphi 0, %s28
      %s32 = sphi 0, %s31
      %s48 = sphi 0, %s32
      %s56 = sphi 0, %s58
      %s59 = sphi 0, %s56
      %s60 = sphi 0, %s59
      %s76 = sphi 0, %s60
      %s84 = sphi 0, %s86
      %s87 = sphi 0, %s84
      %s88 = sphi 0, %s87
      %s104 = sphi 0, %s88
      %s110 = sphi 0, %s112
      %s113 = sphi 0, %s110
      %s114 = sphi 0, %s113
      %s130 = sphi 0, %s114
    $region4: #{tpu_custom_call.1} parent=1 // loop_header_branch
      %21 = sbr.rel (%p19) target = $region8
    $region5: #{tpu_custom_call.1} parent=1 // loop_body
      %s23 = ssub.s32 %s18, 1
      %s24 = ssub.s32 %s18, 2
      %s25 = sadd.s32 %s18, 1
      %s26 = ssub.s32 %s18, %s25
      %p27 = scmp.eq.s32.totalorder %s26, 0
      %s29 = sadd.s32 %s28, 1
      %s30 = scalar_select %p27, %s28, %s29
      %p33 = pneg %p27
      %p34 = scmp.eq.s32.totalorder %s18, 1
      %p35 = por %p33, %p34
      %p36 = scmp.ne.s32.totalorder %s28, %s31
      %p37 = scmp.eq.s32.totalorder %s18, 0
      %p38 = por %p36, %p37
      %p39 = scmp.ne.s32.totalorder %s28, %s31
      %p40 = scmp.eq.s32.totalorder %s23, 1
      %p41 = por %p39, %p40
      %p42 = scmp.ne.s32.totalorder %s31, %s32
      %p43 = scmp.eq.s32.totalorder %s23, 0
      %p44 = por %p42, %p43
      %p45 = scmp.ne.s32.totalorder %s31, %s32
      %p46 = scmp.eq.s32.totalorder %s24, 1
      %p47 = por %p45, %p46
      %p49 = scmp.ne.s32.totalorder %s32, %s48
      %p50 = scmp.eq.s32.totalorder %s24, 0
      %p51 = por %p49, %p50
      %s52 = sld [smem:[#allocation3]]
      %s53 = sld [smem:[#allocation3]]
      %s54 = ssub.s32 %s52, %s53
      %p55 = scmp.eq.s32.totalorder %s54, 0
      %s57 = sadd.s32 %s56, 1
      %s58 = scalar_select %p55, %s56, %s57
      %p61 = pneg %p55
      %p62 = scmp.eq.s32.totalorder %s18, 1
      %p63 = por %p61, %p62
      %p64 = scmp.ne.s32.totalorder %s56, %s59
      %p65 = scmp.eq.s32.totalorder %s18, 0
      %p66 = por %p64, %p65
      %p67 = scmp.ne.s32.totalorder %s56, %s59
      %p68 = scmp.eq.s32.totalorder %s23, 1
      %p69 = por %p67, %p68
      %p70 = scmp.ne.s32.totalorder %s59, %s60
      %p71 = scmp.eq.s32.totalorder %s23, 0
      %p72 = por %p70, %p71
      %p73 = scmp.ne.s32.totalorder %s59, %s60
      %p74 = scmp.eq.s32.totalorder %s24, 1
      %p75 = por %p73, %p74
      %p77 = scmp.ne.s32.totalorder %s60, %s76
      %p78 = scmp.eq.s32.totalorder %s24, 0
      %p79 = por %p77, %p78
      %s80 = sld [smem:[#allocation3]]
      %s81 = sld [smem:[#allocation3]]
      %s82 = ssub.s32 %s80, %s81
      %p83 = scmp.eq.s32.totalorder %s82, 0
      %s85 = sadd.s32 %s84, 1
      %s86 = scalar_select %p83, %s84, %s85
      %p89 = pneg %p83
      %p90 = scmp.eq.s32.totalorder %s18, 1
      %p91 = por %p89, %p90
      %p92 = scmp.ne.s32.totalorder %s84, %s87
      %p93 = scmp.eq.s32.totalorder %s18, 0
      %p94 = por %p92, %p93
      %p95 = scmp.ne.s32.totalorder %s84, %s87
      %p96 = scmp.eq.s32.totalorder %s23, 1
      %p97 = por %p95, %p96
      %p98 = scmp.ne.s32.totalorder %s87, %s88
      %p99 = scmp.eq.s32.totalorder %s23, 0
      %p100 = por %p98, %p99
      %p101 = scmp.ne.s32.totalorder %s87, %s88
      %p102 = scmp.eq.s32.totalorder %s24, 1
      %p103 = por %p101, %p102
      %p105 = scmp.ne.s32.totalorder %s88, %s104
      %p106 = scmp.eq.s32.totalorder %s24, 0
      %p107 = por %p105, %p106
      %s108 = ssub.s32 %s18, %s25
      %p109 = scmp.eq.s32.totalorder %s108, 0
      %s111 = sadd.s32 %s110, 1
      %s112 = scalar_select %p109, %s110, %s111
      %p115 = pneg %p109
      %p116 = scmp.eq.s32.totalorder %s18, 1
      %p117 = por %p115, %p116
      %p118 = scmp.ne.s32.totalorder %s110, %s113
      %p119 = scmp.eq.s32.totalorder %s18, 0
      %p120 = por %p118, %p119
      %p121 = scmp.ne.s32.totalorder %s110, %s113
      %p122 = scmp.eq.s32.totalorder %s23, 1
      %p123 = por %p121, %p122
      %p124 = scmp.ne.s32.totalorder %s113, %s114
      %p125 = scmp.eq.s32.totalorder %s23, 0
      %p126 = por %p124, %p125
      %p127 = scmp.ne.s32.totalorder %s113, %s114
      %p128 = scmp.eq.s32.totalorder %s24, 1
      %p129 = por %p127, %p128
      %p131 = scmp.ne.s32.totalorder %s114, %s130
      %p132 = scmp.eq.s32.totalorder %s24, 0
      %p133 = por %p131, %p132
      %p134 = scmp.le.s32.totalorder 1, %s18
      %p135 = scmp.lt.s32.totalorder %s18, 3
      %p136 = pnand %p134, %p135
      %p137 = pneg %p136
      // Predicated region
      $region9: #{tpu_custom_call.1} parent=5 // pred_check
        _
      $region10: #{tpu_custom_call.1} parent=5 // pred_check_branch
        %139 = sbr.rel (%p136) target = $region12
      $region11: #{tpu_custom_call.1} parent=5 // pred_region
        %s140 = ssub.s32 %s18, 1
        // Predicated region
        $region13: #{tpu_custom_call.1} parent=11 // pred_check
          %p141 = pneg %p72
        $region14: #{tpu_custom_call.1} parent=11 // pred_check_branch
          %143 = sbr.rel (%p141) target = $region16
        $region15: #{tpu_custom_call.1} parent=11 // pred_region
          %s144 = sld [smem:[#allocation3]]
          %146 = vsyncadd [#allocation8], 0
          %s147 = smul.addr %s144, 2
          %s148 = scalar_lea.hbm %s2, %s147
          %s150 = sshll.u32 %s148, 4
          %s151 = int_to_ptr.hbm [resolvable:$true] %s150
          %s152 = sshll.u32 [#allocation7], 4
          %s153 = int_to_ptr.vmem [resolvable:$true] %s152
          %155 = dma.hbm_to_vmem [thread:$0]  %s151, 32, %s153, [#allocation8]
        $region16: #{tpu_custom_call.1} parent=11 // pred_fallthru
          _
        // Predicated region
        $region17: #{tpu_custom_call.1} parent=11 // pred_check
          %p156 = pneg %p100
        $region18: #{tpu_custom_call.1} parent=11 // pred_check_branch
          %158 = sbr.rel (%p156) target = $region20
        $region19: #{tpu_custom_call.1} parent=11 // pred_region
          %s159 = sld [smem:[#allocation3]]
          %161 = vsyncadd [#allocation8], 0
          %s162 = smul.addr %s159, 2
          %s163 = scalar_lea.hbm %s3, %s162
          %s165 = sshll.u32 %s163, 4
          %s166 = int_to_ptr.hbm [resolvable:$true] %s165
          %s167 = sshll.u32 [#allocation9], 4
          %s168 = int_to_ptr.vmem [resolvable:$true] %s167
          %170 = dma.hbm_to_vmem [thread:$0]  %s166, 32, %s168, [#allocation8]
        $region20: #{tpu_custom_call.1} parent=11 // pred_fallthru
          _
      $region12: #{tpu_custom_call.1} parent=5 // pred_fallthru
        _
      %p171 = scmp.lt.s32.totalorder %s18, 2
      // Predicated region
      $region21: #{tpu_custom_call.1} parent=5 // pred_check
        %p172 = pneg %p171
      $region22: #{tpu_custom_call.1} parent=5 // pred_check_branch
        %174 = sbr.rel (%p172) target = $region24
      $region23: #{tpu_custom_call.1} parent=5 // pred_region
        // Predicated region
        $region25: #{tpu_custom_call.1} parent=23 // pred_check
          %p175 = pneg %p38
        $region26: #{tpu_custom_call.1} parent=23 // pred_check_branch
          %177 = sbr.rel (%p175) target = $region28
        $region27: #{tpu_custom_call.1} parent=23 // pred_region
          %s178 = sand.u32 %s28, 1
          %s179 = scalar_lea.sflag [#allocation5], %s178
          %s180 = sand.u32 %s28, 1
          %s181 = smul.addr %s180, 2
          %s182 = scalar_lea.vmem [#allocation4], %s181
          %184 = vsyncadd %s179, 0
          %s185 = smul.addr %s18, 2
          %s186 = scalar_lea.hbm %s1, %s185
          %s188 = sshll.u32 %s186, 4
          %s189 = int_to_ptr.hbm [resolvable:$true] %s188
          %s190 = sshll.u32 %s182, 4
          %s191 = int_to_ptr.vmem [resolvable:$true] %s190
          %193 = dma.hbm_to_vmem [thread:$0]  %s189, 32, %s191, %s179
        $region28: #{tpu_custom_call.1} parent=23 // pred_fallthru
          _
      $region24: #{tpu_custom_call.1} parent=5 // pred_fallthru
        _
      %p194 = scmp.le.s32.totalorder 1, %s18
      %p195 = scmp.lt.s32.totalorder %s18, 3
      %p196 = pnand %p194, %p195
      %p197 = pneg %p196
      // Predicated region
      $region29: #{tpu_custom_call.1} parent=5 // pred_check
        _
      $region30: #{tpu_custom_call.1} parent=5 // pred_check_branch
        %199 = sbr.rel (%p196) target = $region32
      $region31: #{tpu_custom_call.1} parent=5 // pred_region
        %s200 = ssub.s32 %s18, 1
        %s201 = sand.u32 %s31, 1
        %s202 = scalar_lea.sflag [#allocation5], %s201
        %s203 = sand.u32 %s31, 1
        %s204 = smul.addr %s203, 2
        %s205 = scalar_lea.vmem [#allocation4], %s204
        // Predicated region
        $region33: #{tpu_custom_call.1} parent=31 // pred_check
          %p206 = pneg %p44
        $region34: #{tpu_custom_call.1} parent=31 // pred_check_branch
          %208 = sbr.rel (%p206) target = $region36
        $region35: #{tpu_custom_call.1} parent=31 // pred_region
          %210 = dma.done %s202, 32
        $region36: #{tpu_custom_call.1} parent=31 // pred_fallthru
          _
        // Predicated region
        $region37: #{tpu_custom_call.1} parent=31 // pred_check
          %p211 = pneg %p72
        $region38: #{tpu_custom_call.1} parent=31 // pred_check_branch
          %213 = sbr.rel (%p211) target = $region40
        $region39: #{tpu_custom_call.1} parent=31 // pred_region
          %215 = dma.done [#allocation8], 32
        $region40: #{tpu_custom_call.1} parent=31 // pred_fallthru
          _
        // Predicated region
        $region41: #{tpu_custom_call.1} parent=31 // pred_check
          %p216 = pneg %p100
        $region42: #{tpu_custom_call.1} parent=31 // pred_check_branch
          %218 = sbr.rel (%p216) target = $region44
        $region43: #{tpu_custom_call.1} parent=31 // pred_region
          %220 = dma.done [#allocation8], 32
        $region44: #{tpu_custom_call.1} parent=31 // pred_fallthru
          _
        %s221 = sand.u32 %s31, 1
        %s222 = scalar_lea.sflag [#allocation5], %s221
        %s223 = sand.u32 %s31, 1
        %s224 = smul.addr %s223, 2
        %s225 = scalar_lea.vmem [#allocation4], %s224
        %p226 = pneg %p44
        %p227 = pneg %p41
        %p228 = pneg %p72
        %p229 = pneg %p69
        %p230 = pneg %p100
        %p231 = pneg %p97
        %p232 = pneg %p126
        %p233 = pneg %p123
        %s234 = sand.u32 %s113, 1
        %s235 = scalar_lea.sflag [#allocation6], %s234
        %s236 = sand.u32 %s113, 1
        %s237 = smul.addr %s236, 2
        %s238 = scalar_lea.vmem [#allocation10], %s237
        %s239 = sld [smem:[#allocation3]]
        %s240 = sld [smem:[#allocation3]]
        %v241 = vld [vmem:[%s205] sm:$0x3]
        %vm242 = vcmask 1041408
        %v243 = vsel %vm242, %v241, 0.0
        %244 = vadd.xlane.f32.xlu0 %v243
        %v245 = vpop.xlane.xlu0 %244
        %v246 = vrot.slane %v245, 4
        %v247 = vadd.f32 %v245, %v246
        %v248 = vrot.slane %v247, 2
        %v249 = vadd.f32 %v247, %v248
        %v250 = vrot.slane %v249, 1
        %v251 = vadd.f32 %v249, %v250
        %s252 = vtos %v251
        %v253 = vrcp.pop 256.0
        %v254 = vmul.f32 256.0, %v253
        %v255 = vsub.f32 1.0, %v254
        %v256 = vmul.f32 %v253, %v255
        %v257 = vadd.f32 %v253, %v256
        %vm258 = vweird.f32 %v253
        %v259 = vsel %vm258, %v253, %v257
        %s260 = vtos %v259
        %s261 = smul.f32 %s252, %s260
        %v262 = vstv %s261
        %v263 = vsub.f32 %v241, %v262
        %v264 = vmul.f32 %v263, %v263
        %v265 = vsel %vm242, %v264, 0.0
        %266 = vadd.xlane.f32.xlu0 %v265
        %v267 = vpop.xlane.xlu0 %266
        %v268 = vrot.slane %v267, 4
        %v269 = vadd.f32 %v267, %v268
        %v270 = vrot.slane %v269, 2
        %v271 = vadd.f32 %v269, %v270
        %v272 = vrot.slane %v271, 1
        %v273 = vadd.f32 %v271, %v272
        %s274 = vtos %v273
        %v275 = vrcp.pop 256.0
        %v276 = vmul.f32 256.0, %v275
        %v277 = vsub.f32 1.0, %v276
        %v278 = vmul.f32 %v275, %v277
        %v279 = vadd.f32 %v275, %v278
        %vm280 = vweird.f32 %v275
        %v281 = vsel %vm280, %v275, %v279
        %s282 = vtos %v281
        %s283 = smul.f32 %s274, %s282
        %s284 = sadd.f32 %s283, 1e-05
        %v285 = vstv %s284
        %v286 = vrsqrt.pop %v285
        %v287 = vmul.f32 %v286, %v285
        %v288 = vmul.f32 %v287, %v286
        %v289 = vmul.f32 0.5, %v288
        %v290 = vsub.f32 1.5, %v289
        %v291 = vmul.f32 %v286, %v290
        %vm292 = vweird.f32 %v285
        %vm293 = vweird.f32 %v286
        %vm294 = vmor %vm292, %vm293
        %v295 = vsel %vm294, %v286, %v291
        %s296 = vtos %v295
        %v297 = vld [vmem:[#allocation7] sm:$0x3]
        %v298 = vstv %s296
        %v299 = vmul.f32 %v298, %v297
        %v300 = vmul.f32 %v263, %v299
        %v301 = vld [vmem:[#allocation9] sm:$0x3]
        %v302 = vadd.f32 %v300, %v301
        %303 = vst [vmem:[%s238] sm:$0x3] %v302
        %s304 = sand.u32 %s113, 1
        %s305 = scalar_lea.sflag [#allocation6], %s304
        %s306 = sand.u32 %s113, 1
        %s307 = smul.addr %s306, 2
        %s308 = scalar_lea.vmem [#allocation10], %s307
        // Predicated region
        $region45: #{tpu_custom_call.1} parent=31 // pred_check
          %p309 = pneg %p123
        $region46: #{tpu_custom_call.1} parent=31 // pred_check_branch
          %311 = sbr.rel (%p309) target = $region48
        $region47: #{tpu_custom_call.1} parent=31 // pred_region
          %313 = vsyncadd %s305, 0
          %s314 = smul.addr %s23, 2
          %s315 = scalar_lea.hbm %s4, %s314
          %s317 = sshll.u32 %s308, 4
          %s318 = int_to_ptr.vmem [resolvable:$true] %s317
          %s319 = sshll.u32 %s315, 4
          %s320 = int_to_ptr.hbm [resolvable:$true] %s319
          %322 = dma.vmem_to_hbm [thread:$0]  %s318, 32, %s320, %s305
        $region48: #{tpu_custom_call.1} parent=31 // pred_fallthru
          _
      $region32: #{tpu_custom_call.1} parent=5 // pred_fallthru
        _
      %p323 = scmp.le.s32.totalorder 2, %s18
      // Predicated region
      $region49: #{tpu_custom_call.1} parent=5 // pred_check
        %p324 = pneg %p323
      $region50: #{tpu_custom_call.1} parent=5 // pred_check_branch
        %326 = sbr.rel (%p324) target = $region52
      $region51: #{tpu_custom_call.1} parent=5 // pred_region
        %s327 = ssub.s32 %s18, 2
        // Predicated region
        $region53: #{tpu_custom_call.1} parent=51 // pred_check
          %p328 = pneg %p129
        $region54: #{tpu_custom_call.1} parent=51 // pred_check_branch
          %330 = sbr.rel (%p328) target = $region56
        $region55: #{tpu_custom_call.1} parent=51 // pred_region
          %s331 = sand.u32 %s114, 1
          %s332 = scalar_lea.sflag [#allocation6], %s331
          %s333 = sand.u32 %s114, 1
          %s334 = smul.addr %s333, 2
          %s335 = scalar_lea.vmem [#allocation10], %s334
          %337 = dma.done %s332, 32
        $region56: #{tpu_custom_call.1} parent=51 // pred_fallthru
          _
      $region52: #{tpu_custom_call.1} parent=5 // pred_fallthru
        _
    $region6: #{tpu_custom_call.1} parent=1 // loop_footer
      %s22 = sadd.s32 1, %s18
    $region7: #{tpu_custom_call.1} parent=1 // loop_footer_branch
      %17 = sbr.rel target = $region3
    $region8: #{tpu_custom_call.1} parent=1 // loop_exit
      _
    %338 = vsyncpa [#allocation5], 1
    %s339 = scalar_lea.sflag [#allocation5], 1
    %340 = vsyncpa %s339, 1
    %341 = vsyncpa [#allocation8], 1
    %342 = vsyncpa [#allocation6], 1
    %s343 = scalar_lea.sflag [#allocation6], 1
    %344 = vsyncpa %s343, 1

</llo_original>
